<compile_context>
chip_gen: v5e
topology: v5e:2x2
jax: 0.10.0
libtpu: 0.0.40
codegen_flags: <defaults>
</compile_context>

<pallas_src>
import math

import jax
import jax.numpy as jnp
from jax.experimental import pallas as pl
from jax.experimental.pallas import tpu as pltpu

Z_DIM = 32
RADIUS = 2.0
N_SERIES_TERMS = 48  # adequate for kappa in [~0, ~15] at f32 precision
DEFAULT_TILE_B = 2048  # lanes per grid step (multiple of 128)


def _round_up(x: int, m: int) -> int:
    return ((x + m - 1) // m) * m


def _make_kernel(z_dim: int, radius: float, n_terms: int):
    d = float(z_dim)
    v = d / 2.0 - 1.0                      # Bessel order
    lgamma_v1 = math.lgamma(v + 1.0)       # log Gamma(v + 1), static scalar
    const = d / 2.0 * math.log(2.0 * math.pi) + d * math.log(radius)

    def kernel(mu_ref, kappa_ref, wc_ref, out_ref):
        # Lane-dense blocks: mu/wc (z_dim, TILE_B); kappa (1, TILE_B).
        mu = mu_ref[...].astype(jnp.float32)
        wc = wc_ref[...].astype(jnp.float32)
        kappa = kappa_ref[...].astype(jnp.float32)

        # ---- ive(v, kappa) = exp(-kappa) * I_v(kappa), scaled power series ----
        #   I_v(x) = sum_k (x/2)^(2k+v) / (k! * Gamma(v+k+1))
        # term_0 carries the exp(-kappa) factor; even/odd chains advance by k+=2:
        #   term_k = term_{k-2} * t^2 / ((k-1) k (v+k-1)(v+k)),  t = (kappa/2)^2
        half = jnp.maximum(kappa * 0.5, 1e-30)     # guard log(0) / v==0 edge case
        t = half * half
        t2 = t * t
        term0 = jnp.exp(v * jnp.log(half) - lgamma_v1 - kappa)
        term1 = term0 * t * (1.0 / (1.0 * (v + 1.0)))
        sum_even = term0
        sum_odd = term1
        te = term0
        to = term1
        for k in range(2, n_terms, 2):
            ce = 1.0 / (float(k) * float(k - 1) * (v + float(k)) * (v + float(k - 1)))
            te = te * (t2 * ce)
            sum_even = sum_even + te
            ko = k + 1
            if ko < n_terms:
                co = 1.0 / (float(ko) * float(ko - 1) * (v + float(ko)) * (v + float(ko - 1)))
                to = to * (t2 * co)
                sum_odd = sum_odd + to
        ive_val = sum_even + sum_odd                # already includes exp(-kappa)

        log_ive_kappa = jnp.log(1e-06 + ive_val)
        log_iv_kappa = log_ive_kappa + kappa

        # ---- cos_theta = <mu, wc> / r : sublane reduce over z (batch stays lane-dense) ----
        cos_theta = jnp.sum(mu * wc, axis=0, keepdims=True) * (1.0 / radius)

        l1 = -kappa * cos_theta
        l2 = -(d / 2.0 - 1.0) * jnp.log(1e-06 + kappa)
        l3 = log_iv_kappa
        losses = l1 + l2 + l3 + const

        # Packed lane-dense output: rows = (losses, l1, l2, l3).
        out_ref[...] = jnp.concatenate([losses, l1, l2, l3], axis=0).astype(out_ref.dtype)

    return kernel


def kl_dirac_vmf(mu, kappa, wc, *, z_dim=Z_DIM, radius=RADIUS,
                 tile_b=DEFAULT_TILE_B, n_terms=N_SERIES_TERMS):
    B = mu.shape[0]
    assert mu.shape == (B, z_dim) and wc.shape == (B, z_dim)
    assert kappa.shape == (B, 1)

    # Lane-dense layout plumbing: batch on lanes (last dim), padded to the tile.
    tile_b = min(tile_b, _round_up(B, 128))
    b_pad = _round_up(B, tile_b)
    pad = b_pad - B

    mu_t = mu.T                      # (z_dim, B)
    wc_t = wc.T                      # (z_dim, B)
    kappa_t = kappa.T                # (1, B)
    if pad:
        mu_t = jnp.pad(mu_t, ((0, 0), (0, pad)))
        wc_t = jnp.pad(wc_t, ((0, 0), (0, pad)))
        kappa_t = jnp.pad(kappa_t, ((0, 0), (0, pad)), constant_values=1.0)

    kernel = _make_kernel(z_dim, radius, n_terms)

    out = pl.pallas_call(
        kernel,
        out_shape=jax.ShapeDtypeStruct((4, b_pad), jnp.float32),
        grid=(b_pad // tile_b,),
        in_specs=[
            pl.BlockSpec((z_dim, tile_b), lambda i: (0, i)),   # mu_t
            pl.BlockSpec((1, tile_b), lambda i: (0, i)),       # kappa_t
            pl.BlockSpec((z_dim, tile_b), lambda i: (0, i)),   # wc_t
        ],
        out_specs=pl.BlockSpec((4, tile_b), lambda i: (0, i)),
        compiler_params=pltpu.CompilerParams(
            dimension_semantics=("parallel",)),
    )(mu_t, kappa_t, wc_t)

    out = out[:, :B]                                # (4, B)
    losses = out[0, :].reshape(B, 1)
    l1 = out[1, :].reshape(B, 1)
    l2 = out[2, :].reshape(B, 1)
    l3 = out[3, :].reshape(B, 1)
    return losses, l1, l2, l3


def _reference(mu, kappa, wc, *, z_dim=Z_DIM, radius=RADIUS):
    # Pure-JAX reference (straightforward scaled series) for a silent sanity check.
    d = float(z_dim)
    v = d / 2.0 - 1.0
    half = jnp.maximum(kappa * 0.5, 1e-30)
    t = half * half
    term = jnp.exp(v * jnp.log(half) - math.lgamma(v + 1.0) - kappa)
    series = term
    for k in range(1, N_SERIES_TERMS):
        term = term * t / (float(k) * (v + float(k)))
        series = series + term
    ive_val = series
    log_iv = jnp.log(1e-06 + ive_val) + kappa
    cos_theta = jnp.sum(mu * wc, axis=1, keepdims=True) / radius
    l1 = -kappa * cos_theta
    l2 = -(d / 2.0 - 1.0) * jnp.log(1e-06 + kappa)
    l3 = log_iv
    losses = l1 + l2 + l3 + d / 2.0 * math.log(2.0 * math.pi) + d * math.log(radius)
    return losses, l1, l2, l3


if __name__ == "__main__":
    B = 8
    key = jax.random.PRNGKey(0)
    k_mu, k_kappa, k_wc = jax.random.split(key, 3)

    # mu / wc: points on a sphere of radius RADIUS; kappa: positive concentration.
    mu = jax.random.normal(k_mu, (B, Z_DIM), dtype=jnp.float32)
    mu = RADIUS * mu / jnp.linalg.norm(mu, axis=1, keepdims=True)
    wc = jax.random.normal(k_wc, (B, Z_DIM), dtype=jnp.float32)
    wc = RADIUS * wc / jnp.linalg.norm(wc, axis=1, keepdims=True)
    kappa = jax.random.uniform(k_kappa, (B, 1), minval=1.0, maxval=10.0,
                               dtype=jnp.float32)

    losses, l1, l2, l3 = jax.block_until_ready(kl_dirac_vmf(mu, kappa, wc))

    ref = _reference(mu, kappa, wc)
    for got, want in zip((losses, l1, l2, l3), ref):
        assert got.shape == (B, 1)
        assert jnp.allclose(got, want, rtol=1e-4, atol=1e-4)

    print("KERNEL_OK")
</pallas_src>

<mosaic_0001>
module attributes {stable_mosaic.version = 11 : i64} {
  func.func @kernel(%arg0: i32, %arg1: memref<32x128xf32, #tpu.memory_space<vmem>>, %arg2: memref<1x128xf32, #tpu.memory_space<vmem>>, %arg3: memref<32x128xf32, #tpu.memory_space<vmem>>, %arg4: memref<4x128xf32, #tpu.memory_space<vmem>>) attributes {dimension_semantics = [#tpu.dimension_semantics<parallel>], iteration_bounds = array<i64: 1>, scalar_prefetch = 0 : i64, scratch_operands = 0 : i64, tpu.core_type = #tpu.core_type<tc>, window_params = [{transform_indices = @transform_0, window_bounds = array<i64: 32, 128>}, {transform_indices = @transform_1, window_bounds = array<i64: 1, 128>}, {transform_indices = @transform_2, window_bounds = array<i64: 32, 128>}, {transform_indices = @transform_3, window_bounds = array<i64: 4, 128>}]} {
    %c0 = arith.constant 0 : index
    %c0_0 = arith.constant 0 : index
    %0 = vector.load %arg1[%c0, %c0_0] : memref<32x128xf32, #tpu.memory_space<vmem>>, vector<32x128xf32>
    %c0_1 = arith.constant 0 : index
    %c0_2 = arith.constant 0 : index
    %1 = vector.load %arg3[%c0_1, %c0_2] : memref<32x128xf32, #tpu.memory_space<vmem>>, vector<32x128xf32>
    %c0_3 = arith.constant 0 : index
    %c0_4 = arith.constant 0 : index
    %2 = vector.load %arg2[%c0_3, %c0_4] : memref<1x128xf32, #tpu.memory_space<vmem>>, vector<1x128xf32>
    %cst = arith.constant 5.000000e-01 : f32
    %3 = vector.broadcast %cst : f32 to vector<1x128xf32>
    %4 = arith.mulf %2, %3 : vector<1x128xf32>
    %cst_5 = arith.constant 1.000000e-30 : f32
    %5 = vector.broadcast %cst_5 : f32 to vector<1x128xf32>
    %6 = arith.maximumf %4, %5 : vector<1x128xf32>
    %7 = arith.mulf %6, %6 : vector<1x128xf32>
    %8 = arith.mulf %7, %7 : vector<1x128xf32>
    %9 = math.log %6 : vector<1x128xf32>
    %cst_6 = arith.constant 1.500000e+01 : f32
    %10 = vector.broadcast %cst_6 : f32 to vector<1x128xf32>
    %11 = arith.mulf %10, %9 : vector<1x128xf32>
    %cst_7 = arith.constant 27.899271 : f32
    %12 = vector.broadcast %cst_7 : f32 to vector<1x128xf32>
    %13 = arith.subf %11, %12 : vector<1x128xf32>
    %14 = arith.subf %13, %2 : vector<1x128xf32>
    %15 = math.exp %14 : vector<1x128xf32>
    %16 = arith.mulf %15, %7 : vector<1x128xf32>
    %cst_8 = arith.constant 6.250000e-02 : f32
    %17 = vector.broadcast %cst_8 : f32 to vector<1x128xf32>
    %18 = arith.mulf %16, %17 : vector<1x128xf32>
    %cst_9 = arith.constant 0.0018382353 : f32
    %19 = vector.broadcast %cst_9 : f32 to vector<1x128xf32>
    %20 = arith.mulf %8, %19 : vector<1x128xf32>
    %21 = arith.mulf %15, %20 : vector<1x128xf32>
    %22 = arith.addf %15, %21 : vector<1x128xf32>
    %cst_10 = arith.constant 5.44662296E-4 : f32
    %23 = vector.broadcast %cst_10 : f32 to vector<1x128xf32>
    %24 = arith.mulf %8, %23 : vector<1x128xf32>
    %25 = arith.mulf %18, %24 : vector<1x128xf32>
    %26 = arith.addf %18, %25 : vector<1x128xf32>
    %cst_11 = arith.constant 2.43664719E-4 : f32
    %27 = vector.broadcast %cst_11 : f32 to vector<1x128xf32>
    %28 = arith.mulf %8, %27 : vector<1x128xf32>
    %29 = arith.mulf %21, %28 : vector<1x128xf32>
    %30 = arith.addf %22, %29 : vector<1x128xf32>
    %cst_12 = arith.constant 1.31578941E-4 : f32
    %31 = vector.broadcast %cst_12 : f32 to vector<1x128xf32>
    %32 = arith.mulf %8, %31 : vector<1x128xf32>
    %33 = arith.mulf %25, %32 : vector<1x128xf32>
    %34 = arith.addf %26, %33 : vector<1x128xf32>
    %cst_13 = arith.constant 7.9365076E-5 : f32
    %35 = vector.broadcast %cst_13 : f32 to vector<1x128xf32>
    %36 = arith.mulf %8, %35 : vector<1x128xf32>
    %37 = arith.mulf %29, %36 : vector<1x128xf32>
    %38 = arith.addf %30, %37 : vector<1x128xf32>
    %cst_14 = arith.constant 5.15357642E-5 : f32
    %39 = vector.broadcast %cst_14 : f32 to vector<1x128xf32>
    %40 = arith.mulf %8, %39 : vector<1x128xf32>
    %41 = arith.mulf %33, %40 : vector<1x128xf32>
    %42 = arith.addf %34, %41 : vector<1x128xf32>
    %cst_15 = arith.constant 3.52907955E-5 : f32
    %43 = vector.broadcast %cst_15 : f32 to vector<1x128xf32>
    %44 = arith.mulf %8, %43 : vector<1x128xf32>
    %45 = arith.mulf %37, %44 : vector<1x128xf32>
    %46 = arith.addf %38, %45 : vector<1x128xf32>
    %cst_16 = arith.constant 2.51610309E-5 : f32
    %47 = vector.broadcast %cst_16 : f32 to vector<1x128xf32>
    %48 = arith.mulf %8, %47 : vector<1x128xf32>
    %49 = arith.mulf %41, %48 : vector<1x128xf32>
    %50 = arith.addf %42, %49 : vector<1x128xf32>
    %cst_17 = arith.constant 1.85185181E-5 : f32
    %51 = vector.broadcast %cst_17 : f32 to vector<1x128xf32>
    %52 = arith.mulf %8, %51 : vector<1x128xf32>
    %53 = arith.mulf %45, %52 : vector<1x128xf32>
    %54 = arith.addf %46, %53 : vector<1x128xf32>
    %cst_18 = arith.constant 1.3986014E-5 : f32
    %55 = vector.broadcast %cst_18 : f32 to vector<1x128xf32>
    %56 = arith.mulf %8, %55 : vector<1x128xf32>
    %57 = arith.mulf %49, %56 : vector<1x128xf32>
    %58 = arith.addf %50, %57 : vector<1x128xf32>
    %cst_19 = arith.constant 1.07916776E-5 : f32
    %59 = vector.broadcast %cst_19 : f32 to vector<1x128xf32>
    %60 = arith.mulf %8, %59 : vector<1x128xf32>
    %61 = arith.mulf %53, %60 : vector<1x128xf32>
    %62 = arith.addf %54, %61 : vector<1x128xf32>
    %cst_20 = arith.constant 8.47917544E-6 : f32
    %63 = vector.broadcast %cst_20 : f32 to vector<1x128xf32>
    %64 = arith.mulf %8, %63 : vector<1x128xf32>
    %65 = arith.mulf %57, %64 : vector<1x128xf32>
    %66 = arith.addf %58, %65 : vector<1x128xf32>
    %cst_21 = arith.constant 6.7666324E-6 : f32
    %67 = vector.broadcast %cst_21 : f32 to vector<1x128xf32>
    %68 = arith.mulf %8, %67 : vector<1x128xf32>
    %69 = arith.mulf %61, %68 : vector<1x128xf32>
    %70 = arith.addf %62, %69 : vector<1x128xf32>
    %cst_22 = arith.constant 5.47345371E-6 : f32
    %71 = vector.broadcast %cst_22 : f32 to vector<1x128xf32>
    %72 = arith.mulf %8, %71 : vector<1x128xf32>
    %73 = arith.mulf %65, %72 : vector<1x128xf32>
    %74 = arith.addf %66, %73 : vector<1x128xf32>
    %cst_23 = arith.constant 4.48028686E-6 : f32
    %75 = vector.broadcast %cst_23 : f32 to vector<1x128xf32>
    %76 = arith.mulf %8, %75 : vector<1x128xf32>
    %77 = arith.mulf %69, %76 : vector<1x128xf32>
    %78 = arith.addf %70, %77 : vector<1x128xf32>
    %cst_24 = arith.constant 3.70611951E-6 : f32
    %79 = vector.broadcast %cst_24 : f32 to vector<1x128xf32>
    %80 = arith.mulf %8, %79 : vector<1x128xf32>
    %81 = arith.mulf %73, %80 : vector<1x128xf32>
    %82 = arith.addf %74, %81 : vector<1x128xf32>
    %cst_25 = arith.constant 3.09467214E-6 : f32
    %83 = vector.broadcast %cst_25 : f32 to vector<1x128xf32>
    %84 = arith.mulf %8, %83 : vector<1x128xf32>
    %85 = arith.mulf %77, %84 : vector<1x128xf32>
    %86 = arith.addf %78, %85 : vector<1x128xf32>
    %cst_26 = arith.constant 2.60603974E-6 : f32
    %87 = vector.broadcast %cst_26 : f32 to vector<1x128xf32>
    %88 = arith.mulf %8, %87 : vector<1x128xf32>
    %89 = arith.mulf %81, %88 : vector<1x128xf32>
    %90 = arith.addf %82, %89 : vector<1x128xf32>
    %cst_27 = arith.constant 2.2114109E-6 : f32
    %91 = vector.broadcast %cst_27 : f32 to vector<1x128xf32>
    %92 = arith.mulf %8, %91 : vector<1x128xf32>
    %93 = arith.mulf %85, %92 : vector<1x128xf32>
    %94 = arith.addf %86, %93 : vector<1x128xf32>
    %cst_28 = arith.constant 1.88964475E-6 : f32
    %95 = vector.broadcast %cst_28 : f32 to vector<1x128xf32>
    %96 = arith.mulf %8, %95 : vector<1x128xf32>
    %97 = arith.mulf %89, %96 : vector<1x128xf32>
    %98 = arith.addf %90, %97 : vector<1x128xf32>
    %cst_29 = arith.constant 1.62500157E-6 : f32
    %99 = vector.broadcast %cst_29 : f32 to vector<1x128xf32>
    %100 = arith.mulf %8, %99 : vector<1x128xf32>
    %101 = arith.mulf %93, %100 : vector<1x128xf32>
    %102 = arith.addf %94, %101 : vector<1x128xf32>
    %cst_30 = arith.constant 1.4056078E-6 : f32
    %103 = vector.broadcast %cst_30 : f32 to vector<1x128xf32>
    %104 = arith.mulf %8, %103 : vector<1x128xf32>
    %105 = arith.mulf %97, %104 : vector<1x128xf32>
    %106 = arith.addf %98, %105 : vector<1x128xf32>
    %cst_31 = arith.constant 1.22239828E-6 : f32
    %107 = vector.broadcast %cst_31 : f32 to vector<1x128xf32>
    %108 = arith.mulf %8, %107 : vector<1x128xf32>
    %109 = arith.mulf %101, %108 : vector<1x128xf32>
    %110 = arith.addf %102, %109 : vector<1x128xf32>
    %cst_32 = arith.constant 1.06837604E-6 : f32
    %111 = vector.broadcast %cst_32 : f32 to vector<1x128xf32>
    %112 = arith.mulf %8, %111 : vector<1x128xf32>
    %113 = arith.mulf %105, %112 : vector<1x128xf32>
    %114 = arith.addf %106, %113 : vector<1x128xf32>
    %cst_33 = arith.constant 9.38086316E-7 : f32
    %115 = vector.broadcast %cst_33 : f32 to vector<1x128xf32>
    %116 = arith.mulf %8, %115 : vector<1x128xf32>
    %117 = arith.mulf %109, %116 : vector<1x128xf32>
    %118 = arith.addf %110, %117 : vector<1x128xf32>
    %cst_34 = arith.constant 8.2723659E-7 : f32
    %119 = vector.broadcast %cst_34 : f32 to vector<1x128xf32>
    %120 = arith.mulf %8, %119 : vector<1x128xf32>
    %121 = arith.mulf %113, %120 : vector<1x128xf32>
    %122 = arith.addf %114, %121 : vector<1x128xf32>
    %cst_35 = arith.constant 7.3242046E-7 : f32
    %123 = vector.broadcast %cst_35 : f32 to vector<1x128xf32>
    %124 = arith.mulf %8, %123 : vector<1x128xf32>
    %125 = arith.mulf %117, %124 : vector<1x128xf32>
    %126 = arith.addf %118, %125 : vector<1x128xf32>
    %cst_36 = arith.constant 6.50912853E-7 : f32
    %127 = vector.broadcast %cst_36 : f32 to vector<1x128xf32>
    %128 = arith.mulf %8, %127 : vector<1x128xf32>
    %129 = arith.mulf %121, %128 : vector<1x128xf32>
    %130 = arith.addf %122, %129 : vector<1x128xf32>
    %cst_37 = arith.constant 5.80517849E-7 : f32
    %131 = vector.broadcast %cst_37 : f32 to vector<1x128xf32>
    %132 = arith.mulf %8, %131 : vector<1x128xf32>
    %133 = arith.mulf %125, %132 : vector<1x128xf32>
    %134 = arith.addf %126, %133 : vector<1x128xf32>
    %cst_38 = arith.constant 5.19453522E-7 : f32
    %135 = vector.broadcast %cst_38 : f32 to vector<1x128xf32>
    %136 = arith.mulf %8, %135 : vector<1x128xf32>
    %137 = arith.mulf %129, %136 : vector<1x128xf32>
    %138 = arith.addf %130, %137 : vector<1x128xf32>
    %cst_39 = arith.constant 4.66264822E-7 : f32
    %139 = vector.broadcast %cst_39 : f32 to vector<1x128xf32>
    %140 = arith.mulf %8, %139 : vector<1x128xf32>
    %141 = arith.mulf %133, %140 : vector<1x128xf32>
    %142 = arith.addf %134, %141 : vector<1x128xf32>
    %cst_40 = arith.constant 4.19756077E-7 : f32
    %143 = vector.broadcast %cst_40 : f32 to vector<1x128xf32>
    %144 = arith.mulf %8, %143 : vector<1x128xf32>
    %145 = arith.mulf %137, %144 : vector<1x128xf32>
    %146 = arith.addf %138, %145 : vector<1x128xf32>
    %cst_41 = arith.constant 3.78939461E-7 : f32
    %147 = vector.broadcast %cst_41 : f32 to vector<1x128xf32>
    %148 = arith.mulf %8, %147 : vector<1x128xf32>
    %149 = arith.mulf %141, %148 : vector<1x128xf32>
    %150 = arith.addf %142, %149 : vector<1x128xf32>
    %cst_42 = arith.constant 3.42994355E-7 : f32
    %151 = vector.broadcast %cst_42 : f32 to vector<1x128xf32>
    %152 = arith.mulf %8, %151 : vector<1x128xf32>
    %153 = arith.mulf %145, %152 : vector<1x128xf32>
    %154 = arith.addf %146, %153 : vector<1x128xf32>
    %cst_43 = arith.constant 3.11235596E-7 : f32
    %155 = vector.broadcast %cst_43 : f32 to vector<1x128xf32>
    %156 = arith.mulf %8, %155 : vector<1x128xf32>
    %157 = arith.mulf %149, %156 : vector<1x128xf32>
    %158 = arith.addf %150, %157 : vector<1x128xf32>
    %cst_44 = arith.constant 2.83088525E-7 : f32
    %159 = vector.broadcast %cst_44 : f32 to vector<1x128xf32>
    %160 = arith.mulf %8, %159 : vector<1x128xf32>
    %161 = arith.mulf %153, %160 : vector<1x128xf32>
    %162 = arith.addf %154, %161 : vector<1x128xf32>
    %cst_45 = arith.constant 2.58068781E-7 : f32
    %163 = vector.broadcast %cst_45 : f32 to vector<1x128xf32>
    %164 = arith.mulf %8, %163 : vector<1x128xf32>
    %165 = arith.mulf %157, %164 : vector<1x128xf32>
    %166 = arith.addf %158, %165 : vector<1x128xf32>
    %cst_46 = arith.constant 2.35766535E-7 : f32
    %167 = vector.broadcast %cst_46 : f32 to vector<1x128xf32>
    %168 = arith.mulf %8, %167 : vector<1x128xf32>
    %169 = arith.mulf %161, %168 : vector<1x128xf32>
    %170 = arith.addf %162, %169 : vector<1x128xf32>
    %cst_47 = arith.constant 2.15833552E-7 : f32
    %171 = vector.broadcast %cst_47 : f32 to vector<1x128xf32>
    %172 = arith.mulf %8, %171 : vector<1x128xf32>
    %173 = arith.mulf %165, %172 : vector<1x128xf32>
    %174 = arith.addf %166, %173 : vector<1x128xf32>
    %cst_48 = arith.constant 1.97972753E-7 : f32
    %175 = vector.broadcast %cst_48 : f32 to vector<1x128xf32>
    %176 = arith.mulf %8, %175 : vector<1x128xf32>
    %177 = arith.mulf %169, %176 : vector<1x128xf32>
    %178 = arith.addf %170, %177 : vector<1x128xf32>
    %cst_49 = arith.constant 1.81929849E-7 : f32
    %179 = vector.broadcast %cst_49 : f32 to vector<1x128xf32>
    %180 = arith.mulf %8, %179 : vector<1x128xf32>
    %181 = arith.mulf %173, %180 : vector<1x128xf32>
    %182 = arith.addf %174, %181 : vector<1x128xf32>
    %cst_50 = arith.constant 1.67486348E-7 : f32
    %183 = vector.broadcast %cst_50 : f32 to vector<1x128xf32>
    %184 = arith.mulf %8, %183 : vector<1x128xf32>
    %185 = arith.mulf %177, %184 : vector<1x128xf32>
    %186 = arith.addf %178, %185 : vector<1x128xf32>
    %cst_51 = arith.constant 1.544539E-7 : f32
    %187 = vector.broadcast %cst_51 : f32 to vector<1x128xf32>
    %188 = arith.mulf %8, %187 : vector<1x128xf32>
    %189 = arith.mulf %181, %188 : vector<1x128xf32>
    %190 = arith.addf %182, %189 : vector<1x128xf32>
    %cst_52 = arith.constant 1.42669634E-7 : f32
    %191 = vector.broadcast %cst_52 : f32 to vector<1x128xf32>
    %192 = arith.mulf %8, %191 : vector<1x128xf32>
    %193 = arith.mulf %185, %192 : vector<1x128xf32>
    %194 = arith.addf %186, %193 : vector<1x128xf32>
    %cst_53 = arith.constant 1.31992294E-7 : f32
    %195 = vector.broadcast %cst_53 : f32 to vector<1x128xf32>
    %196 = arith.mulf %8, %195 : vector<1x128xf32>
    %197 = arith.mulf %189, %196 : vector<1x128xf32>
    %198 = arith.addf %190, %197 : vector<1x128xf32>
    %cst_54 = arith.constant 1.22298971E-7 : f32
    %199 = vector.broadcast %cst_54 : f32 to vector<1x128xf32>
    %200 = arith.mulf %8, %199 : vector<1x128xf32>
    %201 = arith.mulf %193, %200 : vector<1x128xf32>
    %202 = arith.addf %194, %201 : vector<1x128xf32>
    %203 = arith.addf %198, %202 : vector<1x128xf32>
    %cst_55 = arith.constant 9.99999997E-7 : f32
    %204 = vector.broadcast %cst_55 : f32 to vector<1x128xf32>
    %205 = arith.addf %204, %203 : vector<1x128xf32>
    %206 = math.log %205 : vector<1x128xf32>
    %207 = arith.addf %206, %2 : vector<1x128xf32>
    %208 = arith.mulf %0, %1 : vector<32x128xf32>
    %cst_56 = arith.constant dense<0.000000e+00> : vector<128xf32>
    %209 = vector.multi_reduction <add>, %208, %cst_56 [0] : vector<32x128xf32> to vector<128xf32>
    %210 = vector.shape_cast %209 : vector<128xf32> to vector<1x128xf32>
    %cst_57 = arith.constant 5.000000e-01 : f32
    %211 = vector.broadcast %cst_57 : f32 to vector<1x128xf32>
    %212 = arith.mulf %210, %211 : vector<1x128xf32>
    %cst_58 = arith.constant 0.000000e+00 : f32
    %213 = vector.broadcast %cst_58 : f32 to vector<1x128xf32>
    %214 = arith.subf %213, %2 : vector<1x128xf32>
    %215 = arith.mulf %214, %212 : vector<1x128xf32>
    %cst_59 = arith.constant 9.99999997E-7 : f32
    %216 = vector.broadcast %cst_59 : f32 to vector<1x128xf32>
    %217 = arith.addf %216, %2 : vector<1x128xf32>
    %218 = math.log %217 : vector<1x128xf32>
    %cst_60 = arith.constant -1.500000e+01 : f32
    %219 = vector.broadcast %cst_60 : f32 to vector<1x128xf32>
    %220 = arith.mulf %219, %218 : vector<1x128xf32>
    %221 = arith.addf %215, %220 : vector<1x128xf32>
    %222 = arith.addf %221, %207 : vector<1x128xf32>
    %cst_61 = arith.constant 51.5867424 : f32
    %223 = vector.broadcast %cst_61 : f32 to vector<1x128xf32>
    %224 = arith.addf %222, %223 : vector<1x128xf32>
    %225 = tpu.concatenate %224, %215, %220, %207 in 0 : vector<1x128xf32>, vector<1x128xf32>, vector<1x128xf32>, vector<1x128xf32> -> vector<4x128xf32>
    %c0_62 = arith.constant 0 : index
    %c0_63 = arith.constant 0 : index
    %226 = vector.load %arg4[%c0_62, %c0_63] : memref<4x128xf32, #tpu.memory_space<vmem>>, vector<4x128xf32>
    tpu.vector_store %arg4[%c0_62, %c0_63], %225 {strides = array<i32>} : memref<4x128xf32, #tpu.memory_space<vmem>>, vector<4x128xf32>,
    return
  }
  func.func @transform_0(%arg0: i32) -> (i32, i32) {
    %c0_i32 = arith.constant 0 : i32
    %c0_i32_0 = arith.constant 0 : i32
    return %c0_i32, %arg0 : i32, i32
  }
  func.func @transform_1(%arg0: i32) -> (i32, i32) {
    %c0_i32 = arith.constant 0 : i32
    %c0_i32_0 = arith.constant 0 : i32
    return %c0_i32, %arg0 : i32, i32
  }
  func.func @transform_2(%arg0: i32) -> (i32, i32) {
    %c0_i32 = arith.constant 0 : i32
    %c0_i32_0 = arith.constant 0 : i32
    return %c0_i32, %arg0 : i32, i32
  }
  func.func @transform_3(%arg0: i32) -> (i32, i32) {
    %c0_i32 = arith.constant 0 : i32
    %c0_i32_0 = arith.constant 0 : i32
    return %c0_i32, %arg0 : i32, i32
  }
}

</mosaic_0001>

<llo_original>
// kernel: tpu_custom_call.1
$region0: #{tpu_custom_call.1}
  #allocation0 [shape = 'u32[]', space=smem, size = 0x4, offset = 0x4, fixed_abs, tag = 'smem constant byte address 0x4 - core index']
  #allocation1 [shape = 'u32[72,128]{1,0:T(1,128)}', space=vmem, size = 0x9000, scoped, tag = 'internal scratch']
  %s0 = inlined_call_operand.hbm [shape: f32[32,128], index: 0, kind: input, shape index: {}]
  %s1 = inlined_call_operand.hbm [shape: f32[1,128], index: 1, kind: input, shape index: {}]
  %s2 = inlined_call_operand.hbm [shape: f32[32,128], index: 2, kind: input, shape index: {}]
  %s3 = inlined_call_operand.hbm [shape: f32[4,128], index: 3, kind: output, shape index: {}]
  %s4 = sld [smem:[#allocation0]]
  $region34: #{tpu_custom_call.1} parent=0
    _
  %s6 = ssub.s32 1, %s4
  %s7 = scalar_select 0, %s6, %s4
  $region1: #{tpu_custom_call.1} parent=0
    #allocation2 [shape = 'u8[16384]{0}', space=vmem, size = 0x4000, scoped, tag = 'input window, operand 0, single buffered']
    #allocation3 [shape = 's32[1]{0}', space=sflag, size = 0x4, scoped, tag = 'scoped memory for tpu_custom_call.1']
    #allocation4 [shape = 's32[1]{0}', space=sflag, size = 0x4, scoped, tag = 'scoped memory for tpu_custom_call.1']
    #allocation5 [shape = 'u8[512]{0}', space=vmem, size = 0x400, scoped, tag = 'input window, operand 1, single buffered']
    #allocation6 [shape = 's32[1]{0}', space=sflag, size = 0x4, scoped, tag = 'scoped memory for tpu_custom_call.1']
    #allocation7 [shape = 'u8[16384]{0}', space=vmem, size = 0x4000, scoped, tag = 'input window, operand 2, single buffered']
    #allocation8 [shape = 'u8[2048]{0}', space=vmem, size = 0x800, scoped, tag = 'output window, operand 0, single buffered']
    %8 = vsyncpa [#allocation3], 0
    %9 = vsyncpa [#allocation6], 0
    %10 = vsyncpa [#allocation4], 0
    // Predicated region
    $region2: #{tpu_custom_call.1} parent=1 // pred_check
      _
    $region3: #{tpu_custom_call.1} parent=1 // pred_check_branch
      %12 = sbr.rel (0) target = $region5
    $region4: #{tpu_custom_call.1} parent=1 // pred_region
      %14 = vsyncadd [#allocation3], 0
      %s15 = sshll.u32 %s0, 4
      %s16 = int_to_ptr.hbm [resolvable:$true] %s15
      %s17 = sshll.u32 [#allocation2], 4
      %s18 = int_to_ptr.vmem [resolvable:$true] %s17
      %23 = dma.hbm_to_vmem [thread:$0]  %s16, 512, %s18, [#allocation3], 128, 128, 8
    $region5: #{tpu_custom_call.1} parent=1 // pred_fallthru
      _
    // Predicated region
    $region6: #{tpu_custom_call.1} parent=1 // pred_check
      _
    $region7: #{tpu_custom_call.1} parent=1 // pred_check_branch
      %25 = sbr.rel (0) target = $region9
    $region8: #{tpu_custom_call.1} parent=1 // pred_region
      %27 = vsyncadd [#allocation6], 0
      %s29 = sshll.u32 %s1, 4
      %s30 = int_to_ptr.hbm [resolvable:$true] %s29
      %s31 = sshll.u32 [#allocation5], 4
      %s32 = int_to_ptr.vmem [resolvable:$true] %s31
      %34 = dma.hbm_to_vmem [thread:$0]  %s30, 16, %s32, [#allocation6]
    $region9: #{tpu_custom_call.1} parent=1 // pred_fallthru
      _
    // Predicated region
    $region10: #{tpu_custom_call.1} parent=1 // pred_check
      _
    $region11: #{tpu_custom_call.1} parent=1 // pred_check_branch
      %36 = sbr.rel (0) target = $region13
    $region12: #{tpu_custom_call.1} parent=1 // pred_region
      %38 = vsyncadd [#allocation6], 0
      %s39 = sshll.u32 %s2, 4
      %s40 = int_to_ptr.hbm [resolvable:$true] %s39
      %s41 = sshll.u32 [#allocation7], 4
      %s42 = int_to_ptr.vmem [resolvable:$true] %s41
      %47 = dma.hbm_to_vmem [thread:$0]  %s40, 512, %s42, [#allocation6], 128, 128, 8
    $region13: #{tpu_custom_call.1} parent=1 // pred_fallthru
      _
    // Predicated region
    $region14: #{tpu_custom_call.1} parent=1 // pred_check
      _
    $region15: #{tpu_custom_call.1} parent=1 // pred_check_branch
      %49 = sbr.rel (0) target = $region17
    $region16: #{tpu_custom_call.1} parent=1 // pred_region
      %51 = dma.done [#allocation3], 512
    $region17: #{tpu_custom_call.1} parent=1 // pred_fallthru
      _
    // Predicated region
    $region18: #{tpu_custom_call.1} parent=1 // pred_check
      _
    $region19: #{tpu_custom_call.1} parent=1 // pred_check_branch
      %53 = sbr.rel (0) target = $region21
    $region20: #{tpu_custom_call.1} parent=1 // pred_region
      %55 = dma.done [#allocation6], 16
    $region21: #{tpu_custom_call.1} parent=1 // pred_fallthru
      _
    // Predicated region
    $region22: #{tpu_custom_call.1} parent=1 // pred_check
      _
    $region23: #{tpu_custom_call.1} parent=1 // pred_check_branch
      %57 = sbr.rel (0) target = $region25
    $region24: #{tpu_custom_call.1} parent=1 // pred_region
      %59 = dma.done [#allocation6], 512
    $region25: #{tpu_custom_call.1} parent=1 // pred_fallthru
      _
    %v60 = vld [vmem:[#allocation2] sm:$0xff]
    %v61 = vld [vmem:[#allocation2 + $0x8] sm:$0xff]
    %v62 = vld [vmem:[#allocation2 + $0x10] sm:$0xff]
    %v63 = vld [vmem:[#allocation2 + $0x18] sm:$0xff]
    %v64 = vld [vmem:[#allocation7] sm:$0xff]
    %v65 = vld [vmem:[#allocation7 + $0x8] sm:$0xff]
    %v66 = vld [vmem:[#allocation7 + $0x10] sm:$0xff]
    %v67 = vld [vmem:[#allocation7 + $0x18] sm:$0xff]
    %v68 = vld [vmem:[#allocation5] sm:$0x1]
    %v69 = vmul.f32 %v68, 0.5
    %v70 = vmax.f32 %v69, 1e-30
    %v71 = vmul.f32 %v70, %v70
    %v72 = vmul.f32 %v71, %v71
    %v73 = vlog2.pop %v70
    %v74 = vmul.f32 %v73, 0.6931472
    %v75 = vmul.f32 %v74, 15.0
    %v76 = vsub.f32 %v75, 27.899271
    %v77 = vsub.f32 %v76, %v68
    %v78 = vmul.f32 %v77, 1.442695
    %v79 = vpow.pop %v78
    %v80 = vmul.f32 %v79, %v71
    %v81 = vmul.f32 %v80, 0.0625
    %v82 = vmul.f32 %v72, 0.0018382353
    %v83 = vmul.f32 %v79, %v82
    %v84 = vadd.f32 %v79, %v83
    %v85 = vmul.f32 %v72, 0.0005446623
    %v86 = vmul.f32 %v81, %v85
    %v87 = vadd.f32 %v81, %v86
    %v88 = vmul.f32 %v72, 0.00024366472
    %v89 = vmul.f32 %v83, %v88
    %v90 = vadd.f32 %v84, %v89
    %v91 = vmul.f32 %v72, 0.00013157894
    %v92 = vmul.f32 %v86, %v91
    %v93 = vadd.f32 %v87, %v92
    %v94 = vmul.f32 %v72, 7.9365076e-05
    %v95 = vmul.f32 %v89, %v94
    %v96 = vadd.f32 %v90, %v95
    %v97 = vmul.f32 %v72, 5.1535764e-05
    %v98 = vmul.f32 %v92, %v97
    %v99 = vadd.f32 %v93, %v98
    %v100 = vmul.f32 %v72, 3.5290795e-05
    %v101 = vmul.f32 %v95, %v100
    %v102 = vadd.f32 %v96, %v101
    %v103 = vmul.f32 %v72, 2.516103e-05
    %v104 = vmul.f32 %v98, %v103
    %v105 = vadd.f32 %v99, %v104
    %v106 = vmul.f32 %v72, 1.8518518e-05
    %v107 = vmul.f32 %v101, %v106
    %v108 = vadd.f32 %v102, %v107
    %v109 = vmul.f32 %v72, 1.3986014e-05
    %v110 = vmul.f32 %v104, %v109
    %v111 = vadd.f32 %v105, %v110
    %v112 = vmul.f32 %v72, 1.0791678e-05
    %v113 = vmul.f32 %v107, %v112
    %v114 = vadd.f32 %v108, %v113
    %v115 = vmul.f32 %v72, 8.479175e-06
    %v116 = vmul.f32 %v110, %v115
    %v117 = vadd.f32 %v111, %v116
    %v118 = vmul.f32 %v72, 6.7666324e-06
    %v119 = vmul.f32 %v113, %v118
    %v120 = vadd.f32 %v114, %v119
    %v121 = vmul.f32 %v72, 5.4734537e-06
    %v122 = vmul.f32 %v116, %v121
    %v123 = vadd.f32 %v117, %v122
    %v124 = vmul.f32 %v72, 4.480287e-06
    %v125 = vmul.f32 %v119, %v124
    %v126 = vadd.f32 %v120, %v125
    %v127 = vmul.f32 %v72, 3.7061195e-06
    %v128 = vmul.f32 %v122, %v127
    %v129 = vadd.f32 %v123, %v128
    %v130 = vmul.f32 %v72, 3.0946721e-06
    %v131 = vmul.f32 %v125, %v130
    %v132 = vadd.f32 %v126, %v131
    %v133 = vmul.f32 %v72, 2.6060397e-06
    %v134 = vmul.f32 %v128, %v133
    %v135 = vadd.f32 %v129, %v134
    %v136 = vmul.f32 %v72, 2.211411e-06
    %v137 = vmul.f32 %v131, %v136
    %v138 = vadd.f32 %v132, %v137
    %v139 = vmul.f32 %v72, 1.8896448e-06
    %v140 = vmul.f32 %v134, %v139
    %v141 = vadd.f32 %v135, %v140
    %v142 = vmul.f32 %v72, 1.6250016e-06
    %v143 = vmul.f32 %v137, %v142
    %v144 = vadd.f32 %v138, %v143
    %v145 = vmul.f32 %v72, 1.4056078e-06
    %v146 = vmul.f32 %v140, %v145
    %v147 = vadd.f32 %v141, %v146
    %v148 = vmul.f32 %v72, 1.2223983e-06
    %v149 = vmul.f32 %v143, %v148
    %v150 = vadd.f32 %v144, %v149
    %v151 = vmul.f32 %v72, 1.068376e-06
    %v152 = vmul.f32 %v146, %v151
    %v153 = vadd.f32 %v147, %v152
    %v154 = vmul.f32 %v72, 9.380863e-07
    %v155 = vmul.f32 %v149, %v154
    %v156 = vadd.f32 %v150, %v155
    %v157 = vmul.f32 %v72, 8.272366e-07
    %v158 = vmul.f32 %v152, %v157
    %v159 = vadd.f32 %v153, %v158
    %v160 = vmul.f32 %v72, 7.3242046e-07
    %v161 = vmul.f32 %v155, %v160
    %v162 = vadd.f32 %v156, %v161
    %v163 = vmul.f32 %v72, 6.5091285e-07
    %v164 = vmul.f32 %v158, %v163
    %v165 = vadd.f32 %v159, %v164
    %v166 = vmul.f32 %v72, 5.8051785e-07
    %v167 = vmul.f32 %v161, %v166
    %v168 = vadd.f32 %v162, %v167
    %v169 = vmul.f32 %v72, 5.194535e-07
    %v170 = vmul.f32 %v164, %v169
    %v171 = vadd.f32 %v165, %v170
    %v172 = vmul.f32 %v72, 4.6626482e-07
    %v173 = vmul.f32 %v167, %v172
    %v174 = vadd.f32 %v168, %v173
    %v175 = vmul.f32 %v72, 4.1975608e-07
    %v176 = vmul.f32 %v170, %v175
    %v177 = vadd.f32 %v171, %v176
    %v178 = vmul.f32 %v72, 3.7893946e-07
    %v179 = vmul.f32 %v173, %v178
    %v180 = vadd.f32 %v174, %v179
    %v181 = vmul.f32 %v72, 3.4299435e-07
    %v182 = vmul.f32 %v176, %v181
    %v183 = vadd.f32 %v177, %v182
    %v184 = vmul.f32 %v72, 3.112356e-07
    %v185 = vmul.f32 %v179, %v184
    %v186 = vadd.f32 %v180, %v185
    %v187 = vmul.f32 %v72, 2.8308853e-07
    %v188 = vmul.f32 %v182, %v187
    %v189 = vadd.f32 %v183, %v188
    %v190 = vmul.f32 %v72, 2.5806878e-07
    %v191 = vmul.f32 %v185, %v190
    %v192 = vadd.f32 %v186, %v191
    %v193 = vmul.f32 %v72, 2.3576654e-07
    %v194 = vmul.f32 %v188, %v193
    %v195 = vadd.f32 %v189, %v194
    %v196 = vmul.f32 %v72, 2.1583355e-07
    %v197 = vmul.f32 %v191, %v196
    %v198 = vadd.f32 %v192, %v197
    %v199 = vmul.f32 %v72, 1.9797275e-07
    %v200 = vmul.f32 %v194, %v199
    %v201 = vadd.f32 %v195, %v200
    %v202 = vmul.f32 %v72, 1.8192985e-07
    %v203 = vmul.f32 %v197, %v202
    %v204 = vadd.f32 %v198, %v203
    %v205 = vmul.f32 %v72, 1.6748635e-07
    %v206 = vmul.f32 %v200, %v205
    %v207 = vadd.f32 %v201, %v206
    %v208 = vmul.f32 %v72, 1.544539e-07
    %v209 = vmul.f32 %v203, %v208
    %v210 = vadd.f32 %v204, %v209
    %v211 = vmul.f32 %v72, 1.4266963e-07
    %v212 = vmul.f32 %v206, %v211
    %v213 = vadd.f32 %v207, %v212
    %v214 = vmul.f32 %v72, 1.319923e-07
    %v215 = vmul.f32 %v209, %v214
    %v216 = vadd.f32 %v210, %v215
    %v217 = vmul.f32 %v72, 1.2229897e-07
    %v218 = vmul.f32 %v212, %v217
    %v219 = vadd.f32 %v213, %v218
    %v220 = vadd.f32 %v216, %v219
    %v221 = vadd.f32 %v220, 1e-06
    %v222 = vlog2.pop %v221
    %v223 = vmul.f32 %v222, 0.6931472
    %v224 = vadd.f32 %v223, %v68
    %v225 = vmul.f32 %v60, %v64
    %v226 = vmul.f32 %v61, %v65
    %v227 = vmul.f32 %v62, %v66
    %v228 = vmul.f32 %v63, %v67
    %v229 = vadd.f32 %v225, %v226
    %v230 = vadd.f32 %v229, %v227
    %v231 = vadd.f32 %v230, %v228
    %v232 = vrot.slane %v231, 4
    %v233 = vadd.f32 %v231, %v232
    %v234 = vrot.slane %v233, 2
    %v235 = vadd.f32 %v233, %v234
    %v236 = vrot.slane %v235, 1
    %v237 = vadd.f32 %v235, %v236
    %v238 = vmul.f32 %v237, 0.5
    %v239 = vsub.f32 0.0, %v68
    %v240 = vmul.f32 %v239, %v238
    %v241 = vadd.f32 %v68, 1e-06
    %v242 = vlog2.pop %v241
    %v243 = vmul.f32 %v242, 0.6931472
    %v244 = vmul.f32 %v243, -15.0
    %v245 = vadd.f32 %v240, %v244
    %v246 = vadd.f32 %v245, %v224
    %v247 = vadd.f32 %v246, 51.586742
    %v249 = vperm.slane %v240, 0
    %v252 = vperm.slane %v244, 0
    %v255 = vperm.slane %v224, 0
    %vm257 = vcmask 1040384
    %v258 = vsel %vm257, %v247, %v249
    %vm259 = vcmask 1041408
    %v260 = vsel %vm259, %v258, %v252
    %vm261 = vcmask 1042432
    %v262 = vsel %vm261, %v260, %v255
    %263 = vst [vmem:[#allocation8] sm:$0xf] %v262
    // Predicated region
    $region26: #{tpu_custom_call.1} parent=1 // pred_check
      _
    $region27: #{tpu_custom_call.1} parent=1 // pred_check_branch
      %265 = sbr.rel (0) target = $region29
    $region28: #{tpu_custom_call.1} parent=1 // pred_region
      %267 = vsyncadd [#allocation4], 0
      %s269 = sshll.u32 [#allocation8], 4
      %s270 = int_to_ptr.vmem [resolvable:$true] %s269
      %s271 = sshll.u32 %s3, 4
      %s272 = int_to_ptr.hbm [resolvable:$true] %s271
      %274 = dma.vmem_to_hbm [thread:$0]  %s270, 64, %s272, [#allocation4]
    $region29: #{tpu_custom_call.1} parent=1 // pred_fallthru
      _
    // Predicated region
    $region30: #{tpu_custom_call.1} parent=1 // pred_check
      _
    $region31: #{tpu_custom_call.1} parent=1 // pred_check_branch
      %276 = sbr.rel (0) target = $region33
    $region32: #{tpu_custom_call.1} parent=1 // pred_region
      %278 = dma.done [#allocation4], 64
    $region33: #{tpu_custom_call.1} parent=1 // pred_fallthru
      _
    %279 = vsyncpa [#allocation3], 1
    %280 = vsyncpa [#allocation6], 1
    %281 = vsyncpa [#allocation4], 1

</llo_original>
